<compile_context>
chip_gen: v5e
topology: v5e:2x2
jax: 0.10.0
libtpu: 0.0.40
codegen_flags: <defaults>
</compile_context>

<pallas_src>
import functools

import jax
import jax.numpy as jnp
from jax.experimental import pallas as pl
from jax.experimental.pallas import tpu as pltpu

_LANE = 128      # lane-tile width
_SUB = 16        # bf16 sublane-tile height
_OUT_FIELDS = 8  # value | logits | log_probs | pre_logits | h | act | alogp | pre_act
_OUT_W = _OUT_FIELDS * _LANE


def _round_up(x, m):
    return ((x + m - 1) // m) * m


# ----------------------------------------------------------------------------
# Weight-slab layout (shared between init_params and the kernel)
# ----------------------------------------------------------------------------
def build_layout(hidden, conv_out, rgbd_c, flow_c, n_act):
    kp = _round_up(9 * (rgbd_c + flow_c), _LANE)   # padded im2col K
    cw = 2 * conv_out                              # [rgbd | flow] conv features
    mw = 2 * hidden                                # [rgbd | flow] hidden features
    gw = 3 * _LANE                                 # GRU gates, one 128-block each
    hw = 2 * _LANE                                 # head: actor block | critic block
    entries = [
        ("conv_w", kp, cw), ("conv_b", 1, cw),
        ("mid_w", cw, mw), ("mid_b", 1, mw),
        ("pre_w", mw, n_act), ("pre_b", 1, n_act),
        ("fuse_w", mw, hidden), ("fuse_b", 1, hidden),
        ("gru_wi", hidden, gw), ("gru_bi", 1, gw),
        ("gru_wh", hidden, gw), ("gru_bh", 1, gw),
        ("head_w", hidden, hw), ("head_b", 1, hw),
    ]
    layout = {}
    r = 0
    for name, rows, cols in entries:
        layout[name] = (r, rows, cols)
        r += _round_up(rows, _SUB)                 # keep every row offset tile-aligned
    total_rows = _round_up(r, _SUB)
    total_cols = _round_up(max(c for _, _, c in entries), _LANE)
    return layout, total_rows, total_cols, kp


# ----------------------------------------------------------------------------
# Fused Pallas kernel: whole policy forward for one batch block
# ----------------------------------------------------------------------------
def _fused_policy_kernel(patches_ref, h_ref, mask_ref, pool_ref, w_ref, out_ref,
                         *, layout, hidden, n_act):
    f32 = jnp.float32
    bf16 = jnp.bfloat16

    def W(name):
        r0, rows, cols = layout[name]
        return w_ref[r0:r0 + rows, 0:cols]         # static, tile-aligned slice

    def dot(a, b):
        return jnp.dot(a.astype(bf16), b.astype(bf16),
                       preferred_element_type=f32)

    relu = lambda v: jnp.maximum(v, 0.0)

    # --- conv encoders (rgbd + flow together via block-diagonal weights) ----
    # patches: (BB*P, Kp) -> conv: (BB*P, 2*conv_out) -> spat: (BB*P, 2*hidden)
    conv = relu(dot(patches_ref[...], W("conv_w")) + W("conv_b").astype(f32))
    spat = relu(dot(conv, W("mid_w")) + W("mid_b").astype(f32))

    # --- per-batch-block mean pooling (block-diagonal ones/P matmul) --------
    pooled = dot(pool_ref[...], spat)                          # (BB, 2*hidden)

    # --- previous-action prediction (flow branch only; rgbd rows are zero) --
    pre_logits = dot(pooled, W("pre_w")) + W("pre_b").astype(f32)   # (BB, A)

    # --- fusion layer --------------------------------------------------------
    fused = relu(dot(pooled, W("fuse_w")) + W("fuse_b").astype(f32))  # (BB, H)

    # --- GRU cell (PyTorch GRUCell semantics), hidden masked by `masks` -----
    # gates live in their own 128-lane blocks -> lane-aligned slices (no XLU).
    h = h_ref[...] * mask_ref[...]
    gi = dot(fused, W("gru_wi")) + W("gru_bi").astype(f32)     # (BB, 3*128)
    gh = dot(h, W("gru_wh")) + W("gru_bh").astype(f32)
    r = jax.nn.sigmoid(gi[:, 0:hidden] + gh[:, 0:hidden])
    z = jax.nn.sigmoid(gi[:, 128:128 + hidden] + gh[:, 128:128 + hidden])
    n = jnp.tanh(gi[:, 256:256 + hidden] + r * gh[:, 256:256 + hidden])
    h_out = (1.0 - z) * n + z * h                              # (BB, hidden)

    # --- critic + actor head (single matmul) + log-softmax ------------------
    # head packed as [actor logits @ 0 | critic value @ 128] -> offset-0 logits
    head = dot(h_out, W("head_w")) + W("head_b").astype(f32)   # (BB, 2*128)
    logits = head[:, 0:n_act]
    value = head[:, 128:129]

    m = jnp.max(logits, axis=-1, keepdims=True)
    lse = jnp.log(jnp.sum(jnp.exp(logits - m), axis=-1, keepdims=True)) + m
    logp = logits - lse

    # --- deterministic action (argmax, first-max tiebreak) + its log-prob ---
    idx = jax.lax.broadcasted_iota(jnp.int32, logits.shape, 1).astype(f32)
    act_idx = jnp.min(jnp.where(logits == m, idx, 1e9), axis=-1, keepdims=True)
    act_logp = jnp.max(logp, axis=-1, keepdims=True)

    pm = jnp.max(pre_logits, axis=-1, keepdims=True)
    pidx = jax.lax.broadcasted_iota(jnp.int32, pre_logits.shape, 1).astype(f32)
    pre_act = jnp.min(jnp.where(pre_logits == pm, pidx, 1e9),
                      axis=-1, keepdims=True)

    # --- packed output slab: each field sits in its own 128-lane block ------
    out_ref[...] = jnp.zeros_like(out_ref)
    out_ref[:, 0:1] = value
    out_ref[:, 128:128 + n_act] = logits
    out_ref[:, 256:256 + n_act] = logp
    out_ref[:, 384:384 + n_act] = pre_logits
    out_ref[:, 512:512 + hidden] = h_out
    out_ref[:, 640:641] = act_idx
    out_ref[:, 768:769] = act_logp
    out_ref[:, 896:897] = pre_act


# ----------------------------------------------------------------------------
# JAX glue: im2col so the conv becomes the fused kernel's matmul A-operand
# TODO(synk): for large images, move patch extraction into the kernel
#             (accumulate 9 shifted matmuls) to avoid the 9x im2col HBM blowup.
# ----------------------------------------------------------------------------
def im2col_nhwc(x_nhwc, kh, kw, stride, pad):
    x = jnp.pad(x_nhwc, ((0, 0), (pad, pad), (pad, pad), (0, 0)))
    _, hp, wp, c = x.shape
    out_h = (hp - kh) // stride + 1
    out_w = (wp - kw) // stride + 1
    cols = []
    for i in range(kh):
        for j in range(kw):
            cols.append(x[:, i:i + stride * out_h:stride,
                          j:j + stride * out_w:stride, :])
    patches = jnp.concatenate(cols, axis=-1)           # (B, oh, ow, kh*kw*C)
    b = x_nhwc.shape[0]
    return patches.reshape(b * out_h * out_w, kh * kw * c), out_h, out_w


# ----------------------------------------------------------------------------
# Parameter construction: deterministic synthetic weights, pre-packed into one
# tile-aligned bf16 slab consumed directly by the fused kernel.
# ----------------------------------------------------------------------------
def init_params(key, *, hidden=32, rgbd_c=4, flow_c=2, conv_out=8, dim_actions=4):
    # TODO(synk): Net_with_flow / CategoricalNet internals are not provided;
    # this is a representative conv+flow-fusion+GRU net with the same outputs.
    layout, wr, wc, kp = build_layout(hidden, conv_out, rgbd_c, flow_c, dim_actions)
    counter = [0]

    def nrm(shape, scale=0.05):
        counter[0] += 1
        return scale * jax.random.normal(jax.random.fold_in(key, counter[0]),
                                         shape, jnp.float32)

    kr, kf = 9 * rgbd_c, 9 * flow_c

    # raw per-branch weights
    rgbd_conv_w, rgbd_conv_b = nrm((kr, conv_out)), nrm((conv_out,))
    flow_conv_w, flow_conv_b = nrm((kf, conv_out)), nrm((conv_out,))
    rgbd_mid_w, rgbd_mid_b = nrm((conv_out, hidden)), nrm((hidden,))
    flow_mid_w, flow_mid_b = nrm((conv_out, hidden)), nrm((hidden,))
    pre_w, pre_b = nrm((hidden, dim_actions)), nrm((dim_actions,))
    fuse_w, fuse_b = nrm((2 * hidden, hidden)), nrm((hidden,))
    critic_w, critic_b = nrm((hidden, 1)), nrm((1,))
    actor_w, actor_b = nrm((hidden, dim_actions)), nrm((dim_actions,))
    gru = {}
    for g in ("r", "z", "n"):
        gru[f"w_i{g}"] = nrm((hidden, hidden))
        gru[f"w_h{g}"] = nrm((hidden, hidden))
        gru[f"b_i{g}"] = nrm((hidden,))
        gru[f"b_h{g}"] = nrm((hidden,))

    # ---- assemble individual packed operands --------------------------------
    conv_w = jnp.zeros((kp, 2 * conv_out), jnp.float32)
    conv_w = conv_w.at[:kr, :conv_out].set(rgbd_conv_w)
    conv_w = conv_w.at[kr:kr + kf, conv_out:].set(flow_conv_w)
    conv_b = jnp.concatenate([rgbd_conv_b, flow_conv_b])[None, :]

    mid_w = jnp.zeros((2 * conv_out, 2 * hidden), jnp.float32)
    mid_w = mid_w.at[:conv_out, :hidden].set(rgbd_mid_w)
    mid_w = mid_w.at[conv_out:, hidden:].set(flow_mid_w)
    mid_b = jnp.concatenate([rgbd_mid_b, flow_mid_b])[None, :]

    pre_w_full = jnp.zeros((2 * hidden, dim_actions), jnp.float32)
    pre_w_full = pre_w_full.at[hidden:, :].set(pre_w)   # flow branch only

    # GRU gates: one 128-lane block per gate (r @ 0, z @ 128, n @ 256)
    gru_wi = jnp.zeros((hidden, 3 * _LANE), jnp.float32)
    gru_wh = jnp.zeros((hidden, 3 * _LANE), jnp.float32)
    gru_bi = jnp.zeros((1, 3 * _LANE), jnp.float32)
    gru_bh = jnp.zeros((1, 3 * _LANE), jnp.float32)
    for gi_, g in enumerate(("r", "z", "n")):
        c0 = gi_ * _LANE
        gru_wi = gru_wi.at[:, c0:c0 + hidden].set(gru[f"w_i{g}"])
        gru_wh = gru_wh.at[:, c0:c0 + hidden].set(gru[f"w_h{g}"])
        gru_bi = gru_bi.at[0, c0:c0 + hidden].set(gru[f"b_i{g}"])
        gru_bh = gru_bh.at[0, c0:c0 + hidden].set(gru[f"b_h{g}"])

    # head: [actor logits @ lanes 0:A | critic value @ lane 128]
    head_w = jnp.zeros((hidden, 2 * _LANE), jnp.float32)
    head_w = head_w.at[:, 0:dim_actions].set(actor_w)
    head_w = head_w.at[:, 128:129].set(critic_w)
    head_b = jnp.zeros((1, 2 * _LANE), jnp.float32)
    head_b = head_b.at[0, 0:dim_actions].set(actor_b)
    head_b = head_b.at[0, 128:129].set(critic_b)

    pieces = {
        "conv_w": conv_w, "conv_b": conv_b,
        "mid_w": mid_w, "mid_b": mid_b,
        "pre_w": pre_w_full, "pre_b": pre_b[None, :],
        "fuse_w": fuse_w, "fuse_b": fuse_b[None, :],
        "gru_wi": gru_wi, "gru_bi": gru_bi,
        "gru_wh": gru_wh, "gru_bh": gru_bh,
        "head_w": head_w, "head_b": head_b,
    }

    # ---- pack everything into ONE tile-aligned bf16 slab --------------------
    slab = jnp.zeros((wr, wc), jnp.float32)
    for name, mat in pieces.items():
        r0, rows, cols = layout[name]
        slab = slab.at[r0:r0 + rows, 0:cols].set(mat)

    return {"wslab": slab.astype(jnp.bfloat16)}


def _pick_batch_block(b):
    for cand in (64, 32, 16, 8):
        if b % cand == 0:
            return cand
    return b   # small / odd batch: single grid step


# ----------------------------------------------------------------------------
# Policy_flow_fusion.act equivalent
# ----------------------------------------------------------------------------
def act(params, observations, rnn_hidden_states, masks, deterministic=True,
        sample_key=None, *, dim_actions=4, conv_out=8):
    rgbd = observations["rgbd"]                         # (B, 4, H, W)  NCHW
    flow = observations["flow"]                         # (B, 2, H, W)  NCHW
    batch = rgbd.shape[0]
    rgbd_c, flow_c = rgbd.shape[1], flow.shape[1]

    h_in = rnn_hidden_states[0]                         # (B, hidden)
    hidden = h_in.shape[1]
    n_act = dim_actions
    assert hidden <= _LANE and n_act <= _LANE, "output slab assumes <=128 lanes/field"

    layout, wr, wc, kp = build_layout(hidden, conv_out, rgbd_c, flow_c, n_act)

    # im2col -> lane-dense bf16 LHS for the fused conv matmul
    rgbd_p, oh, ow = im2col_nhwc(jnp.transpose(rgbd, (0, 2, 3, 1)), 3, 3, 2, 1)
    flow_p, _, _ = im2col_nhwc(jnp.transpose(flow, (0, 2, 3, 1)), 3, 3, 2, 1)
    patches = jnp.concatenate([rgbd_p, flow_p], axis=-1)     # (B*P, 9*(Cr+Cf))
    k_raw = patches.shape[1]
    patches = jnp.pad(patches, ((0, 0), (0, kp - k_raw))).astype(jnp.bfloat16)
    n_pos = oh * ow

    # batch grid (parallel across TensorCores); per-block mean-pool matrix
    bb = _pick_batch_block(batch)
    n_blk = batch // bb
    pool = (jnp.kron(jnp.eye(bb, dtype=jnp.float32),
                     jnp.ones((1, n_pos), jnp.float32)) / n_pos).astype(jnp.bfloat16)

    masks_f = masks.astype(jnp.float32)
    h_in = h_in.astype(jnp.float32)

    grid_spec = pltpu.PrefetchScalarGridSpec(
        num_scalar_prefetch=0,
        grid=(n_blk,),
        in_specs=[
            pl.BlockSpec((bb * n_pos, kp), lambda b: (b, 0)),   # patches (pipelined)
            pl.BlockSpec((bb, hidden), lambda b: (b, 0)),       # hidden state
            pl.BlockSpec((bb, 1), lambda b: (b, 0)),            # masks
            pl.BlockSpec((bb, bb * n_pos), lambda b: (0, 0)),   # pool (resident)
            pl.BlockSpec((wr, wc), lambda b: (0, 0)),           # weight slab (resident)
        ],
        out_specs=pl.BlockSpec((bb, _OUT_W), lambda b: (b, 0)),
    )

    slab = pl.pallas_call(
        functools.partial(_fused_policy_kernel, layout=layout,
                          hidden=hidden, n_act=n_act),
        out_shape=jax.ShapeDtypeStruct((batch, _OUT_W), jnp.float32),
        grid_spec=grid_spec,
        compiler_params=pltpu.CompilerParams(
            dimension_semantics=("parallel",)),
    )(patches, h_in, masks_f, pool, params["wslab"])

    # unpack the 128-lane-aligned slab
    value = slab[:, 0:1]
    logits = slab[:, 128:128 + n_act]
    log_probs = slab[:, 256:256 + n_act]
    _pre_logits = slab[:, 384:384 + n_act]
    h_out = slab[:, 512:512 + hidden]
    act_idx = slab[:, 640:641]
    act_logp = slab[:, 768:769]
    pre_act_f = slab[:, 896:897]

    new_rnn_hidden_states = h_out[None]                 # (1, B, hidden)
    pre_action = pre_act_f.astype(jnp.int32)

    if deterministic:
        action = act_idx.astype(jnp.int32)
        action_log_probs = act_logp
    else:
        # TODO(synk): categorical sampling uses jax.random in the wrapper.
        action = jax.random.categorical(sample_key, logits, axis=-1)
        action = action[:, None].astype(jnp.int32)
        action_log_probs = jnp.take_along_axis(log_probs, action, axis=-1)

    return value, action, action_log_probs, new_rnn_hidden_states, pre_action


# ----------------------------------------------------------------------------
if __name__ == "__main__":
    B, H, W = 2, 16, 16
    HIDDEN = 32
    key = jax.random.PRNGKey(0)
    k_rgbd, k_flow, k_h, k_param = jax.random.split(key, 4)

    observations = {
        "rgbd": jax.random.normal(k_rgbd, (B, 4, H, W), jnp.float32),   # NCHW
        "flow": jax.random.normal(k_flow, (B, 2, H, W), jnp.float32),   # NCHW
    }
    rnn_hidden_states = jax.random.normal(k_h, (1, B, HIDDEN), jnp.float32)
    masks = jnp.ones((B, 1), jnp.float32)

    params = init_params(k_param, hidden=HIDDEN)

    act_jit = jax.jit(act, static_argnames=("deterministic", "dim_actions",
                                            "conv_out"))
    value, action, action_log_probs, new_h, pre_action = act_jit(
        params, observations, rnn_hidden_states, masks, deterministic=True)

    jax.block_until_ready((value, action, action_log_probs, new_h, pre_action))
    assert value.shape == (B, 1)
    assert action.shape == (B, 1) and action.dtype == jnp.int32
    assert action_log_probs.shape == (B, 1)
    assert new_h.shape == (1, B, HIDDEN)
    assert pre_action.shape == (B, 1) and pre_action.dtype == jnp.int32
    print("KERNEL_OK")
</pallas_src>

<mosaic_0001>
module attributes {stable_mosaic.version = 11 : i64} {
  func.func @_fused_policy_kernel(%arg0: i32, %arg1: memref<128x128xbf16, #tpu.memory_space<vmem>>, %arg2: memref<2x32xf32, #tpu.memory_space<vmem>>, %arg3: memref<2x1xf32, #tpu.memory_space<vmem>>, %arg4: memref<2x128xbf16, #tpu.memory_space<vmem>>, %arg5: memref<480x384xbf16, #tpu.memory_space<vmem>>, %arg6: memref<2x1024xf32, #tpu.memory_space<vmem>>) attributes {dimension_semantics = [#tpu.dimension_semantics<parallel>], iteration_bounds = array<i64: 1>, scalar_prefetch = 0 : i64, scratch_operands = 0 : i64, tpu.core_type = #tpu.core_type<tc>, window_params = [{transform_indices = @transform_0, window_bounds = array<i64: 128, 128>}, {transform_indices = @transform_1, window_bounds = array<i64: 2, 32>}, {transform_indices = @transform_2, window_bounds = array<i64: 2, 1>}, {pipeline_mode = #tpu.pipeline_mode<synchronous>, transform_indices = @transform_3, window_bounds = array<i64: 2, 128>}, {pipeline_mode = #tpu.pipeline_mode<synchronous>, transform_indices = @transform_4, window_bounds = array<i64: 480, 384>}, {transform_indices = @transform_5, window_bounds = array<i64: 2, 1024>}]} {
    %c0 = arith.constant 0 : index
    %c0_0 = arith.constant 0 : index
    %0 = vector.load %arg1[%c0, %c0_0] : memref<128x128xbf16, #tpu.memory_space<vmem>>, vector<128x128xbf16>
    %c0_1 = arith.constant 0 : index
    %c0_2 = arith.constant 0 : index
    %1 = vector.load %arg5[%c0_1, %c0_2] : memref<480x384xbf16, #tpu.memory_space<vmem>>, vector<128x16xbf16>
    %cst = arith.constant dense<0.000000e+00> : vector<128x16xf32>
    %2 = tpu.matmul %0, %1, %cst {dimension_numbers = #tpu.dot_dimension_numbers<[1], [0], [0], [1], [0, 0, 1, 1], [], []>} : vector<128x128xbf16>, vector<128x16xbf16>, vector<128x16xf32> -> vector<128x16xf32>
    %c128 = arith.constant 128 : index
    %c0_3 = arith.constant 0 : index
    %3 = vector.load %arg5[%c128, %c0_3] : memref<480x384xbf16, #tpu.memory_space<vmem>>, vector<1x16xbf16>
    %4 = arith.extf %3 : vector<1x16xbf16> to vector<1x16xf32>
    %5 = vector.broadcast %4 : vector<1x16xf32> to vector<128x16xf32>
    %6 = arith.addf %2, %5 : vector<128x16xf32>
    %cst_4 = arith.constant 0.000000e+00 : f32
    %7 = vector.broadcast %cst_4 : f32 to vector<128x16xf32>
    %8 = arith.maximumf %6, %7 : vector<128x16xf32>
    %c144 = arith.constant 144 : index
    %c0_5 = arith.constant 0 : index
    %9 = vector.load %arg5[%c144, %c0_5] : memref<480x384xbf16, #tpu.memory_space<vmem>>, vector<16x64xbf16>
    %10 = arith.truncf %8 : vector<128x16xf32> to vector<128x16xbf16>
    %cst_6 = arith.constant dense<0.000000e+00> : vector<128x64xf32>
    %11 = tpu.matmul %10, %9, %cst_6 {dimension_numbers = #tpu.dot_dimension_numbers<[1], [0], [0], [1], [0, 0, 1, 1], [], []>} : vector<128x16xbf16>, vector<16x64xbf16>, vector<128x64xf32> -> vector<128x64xf32>
    %c160 = arith.constant 160 : index
    %c0_7 = arith.constant 0 : index
    %12 = vector.load %arg5[%c160, %c0_7] : memref<480x384xbf16, #tpu.memory_space<vmem>>, vector<1x64xbf16>
    %13 = arith.extf %12 : vector<1x64xbf16> to vector<1x64xf32>
    %14 = vector.broadcast %13 : vector<1x64xf32> to vector<128x64xf32>
    %15 = arith.addf %11, %14 : vector<128x64xf32>
    %cst_8 = arith.constant 0.000000e+00 : f32
    %16 = vector.broadcast %cst_8 : f32 to vector<128x64xf32>
    %17 = arith.maximumf %15, %16 : vector<128x64xf32>
    %c0_9 = arith.constant 0 : index
    %c0_10 = arith.constant 0 : index
    %18 = vector.load %arg4[%c0_9, %c0_10] : memref<2x128xbf16, #tpu.memory_space<vmem>>, vector<2x128xbf16>
    %19 = arith.truncf %17 : vector<128x64xf32> to vector<128x64xbf16>
    %cst_11 = arith.constant dense<0.000000e+00> : vector<2x64xf32>
    %20 = tpu.matmul %18, %19, %cst_11 {dimension_numbers = #tpu.dot_dimension_numbers<[1], [0], [0], [1], [0, 0, 1, 1], [], []>} : vector<2x128xbf16>, vector<128x64xbf16>, vector<2x64xf32> -> vector<2x64xf32>
    %c176 = arith.constant 176 : index
    %c0_12 = arith.constant 0 : index
    %21 = vector.load %arg5[%c176, %c0_12] : memref<480x384xbf16, #tpu.memory_space<vmem>>, vector<64x4xbf16>
    %22 = arith.truncf %20 : vector<2x64xf32> to vector<2x64xbf16>
    %cst_13 = arith.constant dense<0.000000e+00> : vector<2x4xf32>
    %23 = tpu.matmul %22, %21, %cst_13 {dimension_numbers = #tpu.dot_dimension_numbers<[1], [0], [0], [1], [0, 0, 1, 1], [], []>} : vector<2x64xbf16>, vector<64x4xbf16>, vector<2x4xf32> -> vector<2x4xf32>
    %c240 = arith.constant 240 : index
    %c0_14 = arith.constant 0 : index
    %24 = vector.load %arg5[%c240, %c0_14] : memref<480x384xbf16, #tpu.memory_space<vmem>>, vector<1x4xbf16>
    %25 = arith.extf %24 : vector<1x4xbf16> to vector<1x4xf32>
    %26 = vector.broadcast %25 : vector<1x4xf32> to vector<2x4xf32>
    %27 = arith.addf %23, %26 : vector<2x4xf32>
    %c256 = arith.constant 256 : index
    %c0_15 = arith.constant 0 : index
    %28 = vector.load %arg5[%c256, %c0_15] : memref<480x384xbf16, #tpu.memory_space<vmem>>, vector<64x32xbf16>
    %29 = arith.truncf %20 : vector<2x64xf32> to vector<2x64xbf16>
    %cst_16 = arith.constant dense<0.000000e+00> : vector<2x32xf32>
    %30 = tpu.matmul %29, %28, %cst_16 {dimension_numbers = #tpu.dot_dimension_numbers<[1], [0], [0], [1], [0, 0, 1, 1], [], []>} : vector<2x64xbf16>, vector<64x32xbf16>, vector<2x32xf32> -> vector<2x32xf32>
    %c320 = arith.constant 320 : index
    %c0_17 = arith.constant 0 : index
    %31 = vector.load %arg5[%c320, %c0_17] : memref<480x384xbf16, #tpu.memory_space<vmem>>, vector<1x32xbf16>
    %32 = arith.extf %31 : vector<1x32xbf16> to vector<1x32xf32>
    %33 = vector.broadcast %32 : vector<1x32xf32> to vector<2x32xf32>
    %34 = arith.addf %30, %33 : vector<2x32xf32>
    %cst_18 = arith.constant 0.000000e+00 : f32
    %35 = vector.broadcast %cst_18 : f32 to vector<2x32xf32>
    %36 = arith.maximumf %34, %35 : vector<2x32xf32>
    %c0_19 = arith.constant 0 : index
    %c0_20 = arith.constant 0 : index
    %37 = vector.load %arg2[%c0_19, %c0_20] : memref<2x32xf32, #tpu.memory_space<vmem>>, vector<2x32xf32>
    %c0_21 = arith.constant 0 : index
    %c0_22 = arith.constant 0 : index
    %38 = vector.load %arg3[%c0_21, %c0_22] : memref<2x1xf32, #tpu.memory_space<vmem>>, vector<2x1xf32>
    %39 = vector.broadcast %38 : vector<2x1xf32> to vector<2x32xf32>
    %40 = arith.mulf %37, %39 : vector<2x32xf32>
    %c336 = arith.constant 336 : index
    %c0_23 = arith.constant 0 : index
    %41 = vector.load %arg5[%c336, %c0_23] : memref<480x384xbf16, #tpu.memory_space<vmem>>, vector<32x384xbf16>
    %42 = arith.truncf %36 : vector<2x32xf32> to vector<2x32xbf16>
    %cst_24 = arith.constant dense<0.000000e+00> : vector<2x384xf32>
    %43 = tpu.matmul %42, %41, %cst_24 {dimension_numbers = #tpu.dot_dimension_numbers<[1], [0], [0], [1], [0, 0, 1, 1], [], []>} : vector<2x32xbf16>, vector<32x384xbf16>, vector<2x384xf32> -> vector<2x384xf32>
    %c368 = arith.constant 368 : index
    %c0_25 = arith.constant 0 : index
    %44 = vector.load %arg5[%c368, %c0_25] : memref<480x384xbf16, #tpu.memory_space<vmem>>, vector<1x384xbf16>
    %45 = arith.extf %44 : vector<1x384xbf16> to vector<1x384xf32>
    %46 = vector.broadcast %45 : vector<1x384xf32> to vector<2x384xf32>
    %47 = arith.addf %43, %46 : vector<2x384xf32>
    %c384 = arith.constant 384 : index
    %c0_26 = arith.constant 0 : index
    %48 = vector.load %arg5[%c384, %c0_26] : memref<480x384xbf16, #tpu.memory_space<vmem>>, vector<32x384xbf16>
    %49 = arith.truncf %40 : vector<2x32xf32> to vector<2x32xbf16>
    %cst_27 = arith.constant dense<0.000000e+00> : vector<2x384xf32>
    %50 = tpu.matmul %49, %48, %cst_27 {dimension_numbers = #tpu.dot_dimension_numbers<[1], [0], [0], [1], [0, 0, 1, 1], [], []>} : vector<2x32xbf16>, vector<32x384xbf16>, vector<2x384xf32> -> vector<2x384xf32>
    %c416 = arith.constant 416 : index
    %c0_28 = arith.constant 0 : index
    %51 = vector.load %arg5[%c416, %c0_28] : memref<480x384xbf16, #tpu.memory_space<vmem>>, vector<1x384xbf16>
    %52 = arith.extf %51 : vector<1x384xbf16> to vector<1x384xf32>
    %53 = vector.broadcast %52 : vector<1x384xf32> to vector<2x384xf32>
    %54 = arith.addf %50, %53 : vector<2x384xf32>
    %55 = vector.extract_strided_slice %47 {offsets = [0, 0], sizes = [2, 32], strides = [1, 1]} : vector<2x384xf32> to vector<2x32xf32>
    %56 = vector.extract_strided_slice %54 {offsets = [0, 0], sizes = [2, 32], strides = [1, 1]} : vector<2x384xf32> to vector<2x32xf32>
    %57 = arith.addf %55, %56 : vector<2x32xf32>
    %58 = arith.negf %57 : vector<2x32xf32>
    %59 = math.exp %58 : vector<2x32xf32>
    %cst_29 = arith.constant 1.000000e+00 : f32
    %60 = vector.broadcast %cst_29 : f32 to vector<2x32xf32>
    %61 = arith.addf %60, %59 : vector<2x32xf32>
    %62 = arith.divf %60, %61 : vector<2x32xf32>
    %63 = vector.extract_strided_slice %47 {offsets = [0, 128], sizes = [2, 32], strides = [1, 1]} : vector<2x384xf32> to vector<2x32xf32>
    %64 = vector.extract_strided_slice %54 {offsets = [0, 128], sizes = [2, 32], strides = [1, 1]} : vector<2x384xf32> to vector<2x32xf32>
    %65 = arith.addf %63, %64 : vector<2x32xf32>
    %66 = arith.negf %65 : vector<2x32xf32>
    %67 = math.exp %66 : vector<2x32xf32>
    %cst_30 = arith.constant 1.000000e+00 : f32
    %68 = vector.broadcast %cst_30 : f32 to vector<2x32xf32>
    %69 = arith.addf %68, %67 : vector<2x32xf32>
    %70 = arith.divf %68, %69 : vector<2x32xf32>
    %71 = vector.extract_strided_slice %47 {offsets = [0, 256], sizes = [2, 32], strides = [1, 1]} : vector<2x384xf32> to vector<2x32xf32>
    %72 = vector.extract_strided_slice %54 {offsets = [0, 256], sizes = [2, 32], strides = [1, 1]} : vector<2x384xf32> to vector<2x32xf32>
    %73 = arith.mulf %62, %72 : vector<2x32xf32>
    %74 = arith.addf %71, %73 : vector<2x32xf32>
    %75 = math.tanh %74 : vector<2x32xf32>
    %cst_31 = arith.constant 1.000000e+00 : f32
    %76 = vector.broadcast %cst_31 : f32 to vector<2x32xf32>
    %77 = arith.subf %76, %70 : vector<2x32xf32>
    %78 = arith.mulf %77, %75 : vector<2x32xf32>
    %79 = arith.mulf %70, %40 : vector<2x32xf32>
    %80 = arith.addf %78, %79 : vector<2x32xf32>
    %c432 = arith.constant 432 : index
    %c0_32 = arith.constant 0 : index
    %81 = vector.load %arg5[%c432, %c0_32] : memref<480x384xbf16, #tpu.memory_space<vmem>>, vector<32x256xbf16>
    %82 = arith.truncf %80 : vector<2x32xf32> to vector<2x32xbf16>
    %cst_33 = arith.constant dense<0.000000e+00> : vector<2x256xf32>
    %83 = tpu.matmul %82, %81, %cst_33 {dimension_numbers = #tpu.dot_dimension_numbers<[1], [0], [0], [1], [0, 0, 1, 1], [], []>} : vector<2x32xbf16>, vector<32x256xbf16>, vector<2x256xf32> -> vector<2x256xf32>
    %c464 = arith.constant 464 : index
    %c0_34 = arith.constant 0 : index
    %84 = vector.load %arg5[%c464, %c0_34] : memref<480x384xbf16, #tpu.memory_space<vmem>>, vector<1x256xbf16>
    %85 = arith.extf %84 : vector<1x256xbf16> to vector<1x256xf32>
    %86 = vector.broadcast %85 : vector<1x256xf32> to vector<2x256xf32>
    %87 = arith.addf %83, %86 : vector<2x256xf32>
    %88 = vector.extract_strided_slice %87 {offsets = [0, 0], sizes = [2, 4], strides = [1, 1]} : vector<2x256xf32> to vector<2x4xf32>
    %89 = vector.extract_strided_slice %87 {offsets = [0, 128], sizes = [2, 1], strides = [1, 1]} : vector<2x256xf32> to vector<2x1xf32>
    %cst_35 = arith.constant dense<0xFF800000> : vector<2xf32>
    %90 = vector.multi_reduction <maximumf>, %88, %cst_35 [1] : vector<2x4xf32> to vector<2xf32>
    %91 = vector.shape_cast %90 : vector<2xf32> to vector<2x1xf32>
    %92 = vector.broadcast %91 : vector<2x1xf32> to vector<2x4xf32>
    %93 = arith.subf %88, %92 : vector<2x4xf32>
    %94 = math.exp %93 : vector<2x4xf32>
    %cst_36 = arith.constant dense<0.000000e+00> : vector<2xf32>
    %95 = vector.multi_reduction <add>, %94, %cst_36 [1] : vector<2x4xf32> to vector<2xf32>
    %96 = vector.shape_cast %95 : vector<2xf32> to vector<2x1xf32>
    %97 = math.log %96 : vector<2x1xf32>
    %98 = arith.addf %97, %91 : vector<2x1xf32>
    %99 = vector.broadcast %98 : vector<2x1xf32> to vector<2x4xf32>
    %100 = arith.subf %88, %99 : vector<2x4xf32>
    %101 = tpu.iota {dimensions = array<i32: 1>} : vector<2x4xi32>
    %102 = arith.sitofp %101 : vector<2x4xi32> to vector<2x4xf32>
    %103 = vector.broadcast %91 : vector<2x1xf32> to vector<2x4xf32>
    %104 = arith.cmpf oeq, %88, %103 : vector<2x4xf32>
    %cst_37 = arith.constant 1.000000e+09 : f32
    %105 = vector.broadcast %cst_37 : f32 to vector<2x4xf32>
    %106 = arith.select %104, %102, %105 : vector<2x4xi1>, vector<2x4xf32>
    %cst_38 = arith.constant dense<0x7F800000> : vector<2xf32>
    %107 = vector.multi_reduction <minimumf>, %106, %cst_38 [1] : vector<2x4xf32> to vector<2xf32>
    %108 = vector.shape_cast %107 : vector<2xf32> to vector<2x1xf32>
    %cst_39 = arith.constant dense<0xFF800000> : vector<2xf32>
    %109 = vector.multi_reduction <maximumf>, %100, %cst_39 [1] : vector<2x4xf32> to vector<2xf32>
    %110 = vector.shape_cast %109 : vector<2xf32> to vector<2x1xf32>
    %cst_40 = arith.constant dense<0xFF800000> : vector<2xf32>
    %111 = vector.multi_reduction <maximumf>, %27, %cst_40 [1] : vector<2x4xf32> to vector<2xf32>
    %112 = vector.shape_cast %111 : vector<2xf32> to vector<2x1xf32>
    %113 = tpu.iota {dimensions = array<i32: 1>} : vector<2x4xi32>
    %114 = arith.sitofp %113 : vector<2x4xi32> to vector<2x4xf32>
    %115 = vector.broadcast %112 : vector<2x1xf32> to vector<2x4xf32>
    %116 = arith.cmpf oeq, %27, %115 : vector<2x4xf32>
    %cst_41 = arith.constant 1.000000e+09 : f32
    %117 = vector.broadcast %cst_41 : f32 to vector<2x4xf32>
    %118 = arith.select %116, %114, %117 : vector<2x4xi1>, vector<2x4xf32>
    %cst_42 = arith.constant dense<0x7F800000> : vector<2xf32>
    %119 = vector.multi_reduction <minimumf>, %118, %cst_42 [1] : vector<2x4xf32> to vector<2xf32>
    %120 = vector.shape_cast %119 : vector<2xf32> to vector<2x1xf32>
    %cst_43 = arith.constant 0.000000e+00 : f32
    %121 = vector.broadcast %cst_43 : f32 to vector<2x1024xf32>
    %c0_44 = arith.constant 0 : index
    %c0_45 = arith.constant 0 : index
    %122 = vector.load %arg6[%c0_44, %c0_45] : memref<2x1024xf32, #tpu.memory_space<vmem>>, vector<2x1024xf32>
    tpu.vector_store %arg6[%c0_44, %c0_45], %121 {strides = array<i32>} : memref<2x1024xf32, #tpu.memory_space<vmem>>, vector<2x1024xf32>,
    %c0_46 = arith.constant 0 : index
    %c0_47 = arith.constant 0 : index
    %123 = vector.load %arg6[%c0_46, %c0_47] : memref<2x1024xf32, #tpu.memory_space<vmem>>, vector<2x1xf32>
    tpu.vector_store %arg6[%c0_46, %c0_47], %89 {strides = array<i32>} : memref<2x1024xf32, #tpu.memory_space<vmem>>, vector<2x1xf32>,
    %c0_48 = arith.constant 0 : index
    %c128_49 = arith.constant 128 : index
    %124 = vector.load %arg6[%c0_48, %c128_49] : memref<2x1024xf32, #tpu.memory_space<vmem>>, vector<2x4xf32>
    tpu.vector_store %arg6[%c0_48, %c128_49], %88 {strides = array<i32>} : memref<2x1024xf32, #tpu.memory_space<vmem>>, vector<2x4xf32>,
    %c0_50 = arith.constant 0 : index
    %c256_51 = arith.constant 256 : index
    %125 = vector.load %arg6[%c0_50, %c256_51] : memref<2x1024xf32, #tpu.memory_space<vmem>>, vector<2x4xf32>
    tpu.vector_store %arg6[%c0_50, %c256_51], %100 {strides = array<i32>} : memref<2x1024xf32, #tpu.memory_space<vmem>>, vector<2x4xf32>,
    %c0_52 = arith.constant 0 : index
    %c384_53 = arith.constant 384 : index
    %126 = vector.load %arg6[%c0_52, %c384_53] : memref<2x1024xf32, #tpu.memory_space<vmem>>, vector<2x4xf32>
    tpu.vector_store %arg6[%c0_52, %c384_53], %27 {strides = array<i32>} : memref<2x1024xf32, #tpu.memory_space<vmem>>, vector<2x4xf32>,
    %c0_54 = arith.constant 0 : index
    %c512 = arith.constant 512 : index
    %127 = vector.load %arg6[%c0_54, %c512] : memref<2x1024xf32, #tpu.memory_space<vmem>>, vector<2x32xf32>
    tpu.vector_store %arg6[%c0_54, %c512], %80 {strides = array<i32>} : memref<2x1024xf32, #tpu.memory_space<vmem>>, vector<2x32xf32>,
    %c0_55 = arith.constant 0 : index
    %c640 = arith.constant 640 : index
    %128 = vector.load %arg6[%c0_55, %c640] : memref<2x1024xf32, #tpu.memory_space<vmem>>, vector<2x1xf32>
    tpu.vector_store %arg6[%c0_55, %c640], %108 {strides = array<i32>} : memref<2x1024xf32, #tpu.memory_space<vmem>>, vector<2x1xf32>,
    %c0_56 = arith.constant 0 : index
    %c768 = arith.constant 768 : index
    %129 = vector.load %arg6[%c0_56, %c768] : memref<2x1024xf32, #tpu.memory_space<vmem>>, vector<2x1xf32>
    tpu.vector_store %arg6[%c0_56, %c768], %110 {strides = array<i32>} : memref<2x1024xf32, #tpu.memory_space<vmem>>, vector<2x1xf32>,
    %c0_57 = arith.constant 0 : index
    %c896 = arith.constant 896 : index
    %130 = vector.load %arg6[%c0_57, %c896] : memref<2x1024xf32, #tpu.memory_space<vmem>>, vector<2x1xf32>
    tpu.vector_store %arg6[%c0_57, %c896], %120 {strides = array<i32>} : memref<2x1024xf32, #tpu.memory_space<vmem>>, vector<2x1xf32>,
    return
  }
  func.func @transform_0(%arg0: i32) -> (i32, i32) {
    %c0_i32 = arith.constant 0 : i32
    %c0_i32_0 = arith.constant 0 : i32
    return %arg0, %c0_i32 : i32, i32
  }
  func.func @transform_1(%arg0: i32) -> (i32, i32) {
    %c0_i32 = arith.constant 0 : i32
    %c0_i32_0 = arith.constant 0 : i32
    return %arg0, %c0_i32 : i32, i32
  }
  func.func @transform_2(%arg0: i32) -> (i32, i32) {
    %c0_i32 = arith.constant 0 : i32
    %c0_i32_0 = arith.constant 0 : i32
    return %arg0, %c0_i32 : i32, i32
  }
  func.func @transform_3(%arg0: i32) -> (i32, i32) {
    %c0_i32 = arith.constant 0 : i32
    %c0_i32_0 = arith.constant 0 : i32
    %c0_i32_1 = arith.constant 0 : i32
    return %c0_i32, %c0_i32_0 : i32, i32
  }
  func.func @transform_4(%arg0: i32) -> (i32, i32) {
    %c0_i32 = arith.constant 0 : i32
    %c0_i32_0 = arith.constant 0 : i32
    %c0_i32_1 = arith.constant 0 : i32
    return %c0_i32, %c0_i32_0 : i32, i32
  }
  func.func @transform_5(%arg0: i32) -> (i32, i32) {
    %c0_i32 = arith.constant 0 : i32
    %c0_i32_0 = arith.constant 0 : i32
    return %arg0, %c0_i32 : i32, i32
  }
}

</mosaic_0001>

<llo_original>
// kernel: act.1
$region0: #{act.1}
  #allocation0 [shape = 'u32[]', space=smem, size = 0x4, offset = 0x4, fixed_abs, tag = 'smem constant byte address 0x4 - core index']
  #allocation1 [shape = 'u32[72,128]{1,0:T(1,128)}', space=vmem, size = 0x9000, scoped, tag = 'internal scratch']
  %s0 = inlined_call_operand.vmem [shape: bf16[128,128], index: 0, kind: input, shape index: {}]
  %s1 = inlined_call_operand.vmem [shape: f32[2,32], index: 1, kind: input, shape index: {}]
  %s2 = inlined_call_operand.vmem [shape: f32[2,1], index: 2, kind: input, shape index: {}]
  %s3 = inlined_call_operand.vmem [shape: bf16[2,128], index: 3, kind: input, shape index: {}]
  %s4 = inlined_call_operand.vmem [shape: bf16[480,384], index: 4, kind: input, shape index: {}]
  %s5 = inlined_call_operand.vmem [shape: f32[2,1024], index: 5, kind: output, shape index: {}]
  %s6 = sld [smem:[#allocation0]]
  $region30: #{act.1} parent=0
    _
  %s8 = ssub.s32 1, %s6
  %s9 = scalar_select 0, %s8, %s6
  // Predicated region
  $region2: #{act.1} parent=0 // pred_check
    _
  $region3: #{act.1} parent=0 // pred_check_branch
    %11 = sbr.rel (0) target = $region5
  $region4: #{act.1} parent=0 // pred_region
    _
  $region5: #{act.1} parent=0 // pred_fallthru
    _
  // Predicated region
  $region6: #{act.1} parent=0 // pred_check
    _
  $region7: #{act.1} parent=0 // pred_check_branch
    %13 = sbr.rel (0) target = $region9
  $region8: #{act.1} parent=0 // pred_region
    _
  $region9: #{act.1} parent=0 // pred_fallthru
    _
  // Predicated region
  $region10: #{act.1} parent=0 // pred_check
    _
  $region11: #{act.1} parent=0 // pred_check_branch
    %15 = sbr.rel (0) target = $region13
  $region12: #{act.1} parent=0 // pred_region
    _
  $region13: #{act.1} parent=0 // pred_fallthru
    _
  // Predicated region
  $region14: #{act.1} parent=0 // pred_check
    _
  $region15: #{act.1} parent=0 // pred_check_branch
    %17 = sbr.rel (0) target = $region17
  $region16: #{act.1} parent=0 // pred_region
    _
  $region17: #{act.1} parent=0 // pred_fallthru
    _
  // Predicated region
  $region18: #{act.1} parent=0 // pred_check
    _
  $region19: #{act.1} parent=0 // pred_check_branch
    %19 = sbr.rel (0) target = $region21
  $region20: #{act.1} parent=0 // pred_region
    _
  $region21: #{act.1} parent=0 // pred_fallthru
    _
  %v21 = vld [vmem:[%s0] sm:$0xf]
  %v22 = vld [vmem:[%s0 + $0x4] sm:$0xf]
  %v23 = vld [vmem:[%s0 + $0x8] sm:$0xf]
  %v24 = vld [vmem:[%s0 + $0xc] sm:$0xf]
  %v25 = vld [vmem:[%s0 + $0x10] sm:$0xf]
  %v26 = vld [vmem:[%s0 + $0x14] sm:$0xf]
  %v27 = vld [vmem:[%s0 + $0x18] sm:$0xf]
  %v28 = vld [vmem:[%s0 + $0x1c] sm:$0xf]
  %v29 = vld [vmem:[%s0 + $0x20] sm:$0xf]
  %v30 = vld [vmem:[%s0 + $0x24] sm:$0xf]
  %v31 = vld [vmem:[%s0 + $0x28] sm:$0xf]
  %v32 = vld [vmem:[%s0 + $0x2c] sm:$0xf]
  %v33 = vld [vmem:[%s0 + $0x30] sm:$0xf]
  %v34 = vld [vmem:[%s0 + $0x34] sm:$0xf]
  %v35 = vld [vmem:[%s0 + $0x38] sm:$0xf]
  %v36 = vld [vmem:[%s0 + $0x3c] sm:$0xf]
  %v37 = vld [vmem:[%s4] sm:$0xf]
  %v38 = vld [vmem:[%s4 + $0xc] sm:$0xf]
  %v39 = vld [vmem:[%s4 + $0x18] sm:$0xf]
  %v40 = vld [vmem:[%s4 + $0x24] sm:$0xf]
  %v41 = vld [vmem:[%s4 + $0x30] sm:$0xf]
  %v42 = vld [vmem:[%s4 + $0x3c] sm:$0xf]
  %v43 = vld [vmem:[%s4 + $0x48] sm:$0xf]
  %v44 = vld [vmem:[%s4 + $0x54] sm:$0xf]
  %v45 = vld [vmem:[%s4 + $0x60] sm:$0xf]
  %v46 = vld [vmem:[%s4 + $0x6c] sm:$0xf]
  %v47 = vld [vmem:[%s4 + $0x78] sm:$0xf]
  %v48 = vld [vmem:[%s4 + $0x84] sm:$0xf]
  %v49 = vld [vmem:[%s4 + $0x90] sm:$0xf]
  %v50 = vld [vmem:[%s4 + $0x9c] sm:$0xf]
  %v51 = vld [vmem:[%s4 + $0xa8] sm:$0xf]
  %v52 = vld [vmem:[%s4 + $0xb4] sm:$0xf]
  %v53 = vld [vmem:[%s4 + $0xc0] sm:$0x1]
  %v54 = vunpack.c.l.bf16 %v53
  %v55 = vperm.slane %v54, 0
  %v72 = vunpack.c.l.b16 %v21
  %v73 = vunpack.c.l.b16 %v22
  %v74 = vunpack.c.l.b16 %v23
  %v75 = vunpack.c.l.b16 %v24
  %v76 = vunpack.c.l.b16 %v25
  %v77 = vunpack.c.l.b16 %v26
  %v78 = vunpack.c.l.b16 %v27
  %v79 = vunpack.c.l.b16 %v28
  %v80 = vunpack.c.l.b16 %v29
  %v81 = vunpack.c.l.b16 %v30
  %v82 = vunpack.c.l.b16 %v31
  %v83 = vunpack.c.l.b16 %v32
  %v84 = vunpack.c.l.b16 %v33
  %v85 = vunpack.c.l.b16 %v34
  %v86 = vunpack.c.l.b16 %v35
  %v87 = vunpack.c.l.b16 %v36
  %v88 = vpack.c.b16 %v73, %v72
  %v89 = vpack.c.b16 %v75, %v74
  %v90 = vpack.c.b16 %v77, %v76
  %v91 = vpack.c.b16 %v79, %v78
  %v92 = vpack.c.b16 %v81, %v80
  %v93 = vpack.c.b16 %v83, %v82
  %v94 = vpack.c.b16 %v85, %v84
  %v95 = vpack.c.b16 %v87, %v86
  %v120 = vunpack.c.l.b16 %v37
  %v121 = vunpack.c.l.b16 %v38
  %v122 = vunpack.c.l.b16 %v39
  %v123 = vunpack.c.l.b16 %v40
  %v124 = vunpack.c.l.b16 %v41
  %v125 = vunpack.c.l.b16 %v42
  %v126 = vunpack.c.l.b16 %v43
  %v127 = vunpack.c.l.b16 %v44
  %v128 = vunpack.c.l.b16 %v45
  %v129 = vunpack.c.l.b16 %v46
  %v130 = vunpack.c.l.b16 %v47
  %v131 = vunpack.c.l.b16 %v48
  %v132 = vunpack.c.l.b16 %v49
  %v133 = vunpack.c.l.b16 %v50
  %v134 = vunpack.c.l.b16 %v51
  %v135 = vunpack.c.l.b16 %v52
  %v136 = vpack.c.b16 %v121, %v120
  %v137 = vpack.c.b16 %v123, %v122
  %v138 = vpack.c.b16 %v125, %v124
  %v139 = vpack.c.b16 %v127, %v126
  %v140 = vpack.c.b16 %v129, %v128
  %v141 = vpack.c.b16 %v131, %v130
  %v142 = vpack.c.b16 %v133, %v132
  %v143 = vpack.c.b16 %v135, %v134
  %152 = vmatpush.bf16.msra.mxu0 %v143
  %153 = vmatpush.bf16.msra.mxu0 %v142
  %154 = vmatpush.bf16.msra.mxu0 %v141
  %155 = vmatpush.bf16.msra.mxu0 %v140
  %156 = vmatpush.bf16.msra.mxu0 %v139
  %157 = vmatpush.bf16.msra.mxu0 %v138
  %158 = vmatpush.bf16.msra.mxu0 %v137
  %159 = vmatpush.bf16.msra.mxu0 %v136
  %160 = vmatmul.bf16.gmra.mxu0 %v88
  %v161 = vpop.f32.mrf.mxu0
  %v162 = vadd.f32 %v55, %v161
  %v163 = vpop.f32.mrf.mxu0
  %v164 = vadd.f32 %v55, %v163
  %165 = vmatmul.bf16.gmra.mxu0 %v89
  %v166 = vpop.f32.mrf.mxu0
  %v167 = vadd.f32 %v55, %v166
  %v168 = vpop.f32.mrf.mxu0
  %v169 = vadd.f32 %v55, %v168
  %170 = vmatmul.bf16.gmra.mxu0 %v90
  %v171 = vpop.f32.mrf.mxu0
  %v172 = vadd.f32 %v55, %v171
  %v173 = vpop.f32.mrf.mxu0
  %v174 = vadd.f32 %v55, %v173
  %175 = vmatmul.bf16.gmra.mxu0 %v91
  %v176 = vpop.f32.mrf.mxu0
  %v177 = vadd.f32 %v55, %v176
  %v178 = vpop.f32.mrf.mxu0
  %v179 = vadd.f32 %v55, %v178
  %180 = vmatmul.bf16.gmra.mxu0 %v92
  %v181 = vpop.f32.mrf.mxu0
  %v182 = vadd.f32 %v55, %v181
  %v183 = vpop.f32.mrf.mxu0
  %v184 = vadd.f32 %v55, %v183
  %185 = vmatmul.bf16.gmra.mxu0 %v93
  %v186 = vpop.f32.mrf.mxu0
  %v187 = vadd.f32 %v55, %v186
  %v188 = vpop.f32.mrf.mxu0
  %v189 = vadd.f32 %v55, %v188
  %190 = vmatmul.bf16.gmra.mxu0 %v94
  %v191 = vpop.f32.mrf.mxu0
  %v192 = vadd.f32 %v55, %v191
  %v193 = vpop.f32.mrf.mxu0
  %v194 = vadd.f32 %v55, %v193
  %195 = vmatmul.bf16.gmra.mxu0 %v95
  %v196 = vpop.f32.mrf.mxu0
  %v197 = vadd.f32 %v55, %v196
  %v198 = vpop.f32.mrf.mxu0
  %v199 = vadd.f32 %v55, %v198
  %200 = vdwg.mxu0
  %v201 = vmax.f32 %v162, 0.0
  %v202 = vmax.f32 %v164, 0.0
  %v203 = vmax.f32 %v167, 0.0
  %v204 = vmax.f32 %v169, 0.0
  %v205 = vmax.f32 %v172, 0.0
  %v206 = vmax.f32 %v174, 0.0
  %v207 = vmax.f32 %v177, 0.0
  %v208 = vmax.f32 %v179, 0.0
  %v209 = vmax.f32 %v182, 0.0
  %v210 = vmax.f32 %v184, 0.0
  %v211 = vmax.f32 %v187, 0.0
  %v212 = vmax.f32 %v189, 0.0
  %v213 = vmax.f32 %v192, 0.0
  %v214 = vmax.f32 %v194, 0.0
  %v215 = vmax.f32 %v197, 0.0
  %v216 = vmax.f32 %v199, 0.0
  %v217 = vld [vmem:[%s4 + $0xd8] sm:$0xf]
  %v218 = vld [vmem:[%s4 + $0xe4] sm:$0xf]
  %v219 = vpack.c.bf16 %v202, %v201
  %v220 = vpack.c.bf16 %v204, %v203
  %v221 = vpack.c.bf16 %v206, %v205
  %v222 = vpack.c.bf16 %v208, %v207
  %v223 = vpack.c.bf16 %v210, %v209
  %v224 = vpack.c.bf16 %v212, %v211
  %v225 = vpack.c.bf16 %v214, %v213
  %v226 = vpack.c.bf16 %v216, %v215
  %v227 = vld [vmem:[%s4 + $0xf0] sm:$0x1]
  %v228 = vunpack.c.l.bf16 %v227
  %v229 = vperm.slane %v228, 0
  %v232 = vunpack.c.l.b16 %v217
  %v233 = vunpack.c.l.b16 %v218
  %v234 = vpack.c.b16 %v233, %v232
  %vm236 = vcmask 130048
  %v238 = vsel %vm236, %v219, 0
  %v241 = vsel %vm236, %v220, 0
  %v244 = vsel %vm236, %v221, 0
  %v247 = vsel %vm236, %v222, 0
  %v250 = vsel %vm236, %v223, 0
  %v253 = vsel %vm236, %v224, 0
  %v256 = vsel %vm236, %v225, 0
  %v259 = vsel %vm236, %v226, 0
  %261 = vmatpush.bf16.msra.mxu0 0
  %262 = vmatpush.bf16.msra.mxu0 0
  %263 = vmatpush.bf16.msra.mxu0 0
  %264 = vmatpush.bf16.msra.mxu0 0
  %265 = vmatpush.bf16.msra.mxu0 0
  %266 = vmatpush.bf16.msra.mxu0 0
  %267 = vmatpush.bf16.msra.mxu0 0
  %268 = vmatpush.bf16.msra.mxu0 %v234
  %269 = vmatmul.bf16.gmra.mxu0 %v238
  %v270 = vpop.f32.mrf.mxu0
  %v271 = vadd.f32 %v229, %v270
  %v272 = vpop.f32.mrf.mxu0
  %v273 = vadd.f32 %v229, %v272
  %274 = vmatmul.bf16.gmra.mxu0 %v241
  %v275 = vpop.f32.mrf.mxu0
  %v276 = vadd.f32 %v229, %v275
  %v277 = vpop.f32.mrf.mxu0
  %v278 = vadd.f32 %v229, %v277
  %279 = vmatmul.bf16.gmra.mxu0 %v244
  %v280 = vpop.f32.mrf.mxu0
  %v281 = vadd.f32 %v229, %v280
  %v282 = vpop.f32.mrf.mxu0
  %v283 = vadd.f32 %v229, %v282
  %284 = vmatmul.bf16.gmra.mxu0 %v247
  %v285 = vpop.f32.mrf.mxu0
  %v286 = vadd.f32 %v229, %v285
  %v287 = vpop.f32.mrf.mxu0
  %v288 = vadd.f32 %v229, %v287
  %289 = vmatmul.bf16.gmra.mxu0 %v250
  %v290 = vpop.f32.mrf.mxu0
  %v291 = vadd.f32 %v229, %v290
  %v292 = vpop.f32.mrf.mxu0
  %v293 = vadd.f32 %v229, %v292
  %294 = vmatmul.bf16.gmra.mxu0 %v253
  %v295 = vpop.f32.mrf.mxu0
  %v296 = vadd.f32 %v229, %v295
  %v297 = vpop.f32.mrf.mxu0
  %v298 = vadd.f32 %v229, %v297
  %299 = vmatmul.bf16.gmra.mxu0 %v256
  %v300 = vpop.f32.mrf.mxu0
  %v301 = vadd.f32 %v229, %v300
  %v302 = vpop.f32.mrf.mxu0
  %v303 = vadd.f32 %v229, %v302
  %304 = vmatmul.bf16.gmra.mxu0 %v259
  %v305 = vpop.f32.mrf.mxu0
  %v306 = vadd.f32 %v229, %v305
  %v307 = vpop.f32.mrf.mxu0
  %v308 = vadd.f32 %v229, %v307
  %309 = vdwg.mxu0
  %v310 = vmax.f32 %v271, 0.0
  %v311 = vmax.f32 %v273, 0.0
  %v312 = vmax.f32 %v276, 0.0
  %v313 = vmax.f32 %v278, 0.0
  %v314 = vmax.f32 %v281, 0.0
  %v315 = vmax.f32 %v283, 0.0
  %v316 = vmax.f32 %v286, 0.0
  %v317 = vmax.f32 %v288, 0.0
  %v318 = vmax.f32 %v291, 0.0
  %v319 = vmax.f32 %v293, 0.0
  %v320 = vmax.f32 %v296, 0.0
  %v321 = vmax.f32 %v298, 0.0
  %v322 = vmax.f32 %v301, 0.0
  %v323 = vmax.f32 %v303, 0.0
  %v324 = vmax.f32 %v306, 0.0
  %v325 = vmax.f32 %v308, 0.0
  %v326 = vld [vmem:[%s3] sm:$0x1]
  %v327 = vpack.c.bf16 %v311, %v310
  %v328 = vpack.c.bf16 %v313, %v312
  %v329 = vpack.c.bf16 %v315, %v314
  %v330 = vpack.c.bf16 %v317, %v316
  %v331 = vpack.c.bf16 %v319, %v318
  %v332 = vpack.c.bf16 %v321, %v320
  %v333 = vpack.c.bf16 %v323, %v322
  %v334 = vpack.c.bf16 %v325, %v324
  %335 = vmatpush.bf16.msra.mxu0 %v334
  %336 = vmatpush.bf16.msra.mxu0 %v333
  %337 = vmatpush.bf16.msra.mxu0 %v332
  %338 = vmatpush.bf16.msra.mxu0 %v331
  %339 = vmatpush.bf16.msra.mxu0 %v330
  %340 = vmatpush.bf16.msra.mxu0 %v329
  %341 = vmatpush.bf16.msra.mxu0 %v328
  %342 = vmatpush.bf16.msra.mxu0 %v327
  %343 = vmatmul.bf16.gmra.mxu0 %v326
  %v344 = vpop.f32.mrf.mxu0
  %v345 = vadd.f32 0.0, %v344
  %v346 = vpop.f32.mrf.mxu0
  %347 = vdwg.mxu0
  %v348 = vld [vmem:[%s4 + $0x108] sm:$0xf]
  %v349 = vld [vmem:[%s4 + $0x114] sm:$0xf]
  %v350 = vld [vmem:[%s4 + $0x120] sm:$0xf]
  %v351 = vld [vmem:[%s4 + $0x12c] sm:$0xf]
  %v352 = vld [vmem:[%s4 + $0x138] sm:$0xf]
  %v353 = vld [vmem:[%s4 + $0x144] sm:$0xf]
  %v354 = vld [vmem:[%s4 + $0x150] sm:$0xf]
  %v355 = vld [vmem:[%s4 + $0x15c] sm:$0xf]
  %v356 = vpack.c.bf16 %v345, %v345
  %v357 = vld [vmem:[%s4 + $0x168] sm:$0x1]
  %v358 = vunpack.c.l.bf16 %v357
  %v359 = vperm.slane %v358, 0
  %v368 = vunpack.c.l.b16 %v348
  %v369 = vunpack.c.l.b16 %v349
  %v370 = vunpack.c.l.b16 %v350
  %v371 = vunpack.c.l.b16 %v351
  %v372 = vunpack.c.l.b16 %v352
  %v373 = vunpack.c.l.b16 %v353
  %v374 = vunpack.c.l.b16 %v354
  %v375 = vunpack.c.l.b16 %v355
  %v376 = vpack.c.b16 %v369, %v368
  %v377 = vpack.c.b16 %v371, %v370
  %v378 = vpack.c.b16 %v373, %v372
  %v379 = vpack.c.b16 %v375, %v374
  %vm384 = vcmask 523264
  %v386 = vsel %vm384, %v356, 0
  %388 = vmatpush.bf16.msra.mxu0 0
  %389 = vmatpush.bf16.msra.mxu0 0
  %390 = vmatpush.bf16.msra.mxu0 0
  %391 = vmatpush.bf16.msra.mxu0 0
  %392 = vmatpush.bf16.msra.mxu0 %v379
  %393 = vmatpush.bf16.msra.mxu0 %v378
  %394 = vmatpush.bf16.msra.mxu0 %v377
  %395 = vmatpush.bf16.msra.mxu0 %v376
  %396 = vmatmul.bf16.gmra.mxu0 %v386
  %v397 = vpop.f32.mrf.mxu0
  %v398 = vadd.f32 %v359, %v397
  %v399 = vpop.f32.mrf.mxu0
  %400 = vdwg.mxu0
  %v401 = vld [vmem:[%s4 + $0x180] sm:$0xf]
  %v402 = vld [vmem:[%s4 + $0x18c] sm:$0xf]
  %v403 = vld [vmem:[%s4 + $0x198] sm:$0xf]
  %v404 = vld [vmem:[%s4 + $0x1a4] sm:$0xf]
  %v405 = vld [vmem:[%s4 + $0x1b0] sm:$0xf]
  %v406 = vld [vmem:[%s4 + $0x1bc] sm:$0xf]
  %v407 = vld [vmem:[%s4 + $0x1c8] sm:$0xf]
  %v408 = vld [vmem:[%s4 + $0x1d4] sm:$0xf]
  %v409 = vld [vmem:[%s4 + $0x1e0] sm:$0x1]
  %v410 = vunpack.c.l.bf16 %v409
  %v411 = vperm.slane %v410, 0
  %v420 = vunpack.c.l.b16 %v401
  %v421 = vunpack.c.l.b16 %v402
  %v422 = vunpack.c.l.b16 %v403
  %v423 = vunpack.c.l.b16 %v404
  %v424 = vunpack.c.l.b16 %v405
  %v425 = vunpack.c.l.b16 %v406
  %v426 = vunpack.c.l.b16 %v407
  %v427 = vunpack.c.l.b16 %v408
  %v428 = vpack.c.b16 %v421, %v420
  %v429 = vpack.c.b16 %v423, %v422
  %v430 = vpack.c.b16 %v425, %v424
  %v431 = vpack.c.b16 %v427, %v426
  %436 = vmatpush.bf16.msra.mxu0 0
  %437 = vmatpush.bf16.msra.mxu0 0
  %438 = vmatpush.bf16.msra.mxu0 0
  %439 = vmatpush.bf16.msra.mxu0 0
  %440 = vmatpush.bf16.msra.mxu0 %v431
  %441 = vmatpush.bf16.msra.mxu0 %v430
  %442 = vmatpush.bf16.msra.mxu0 %v429
  %443 = vmatpush.bf16.msra.mxu0 %v428
  %444 = vmatmul.bf16.gmra.mxu0 %v386
  %v445 = vpop.f32.mrf.mxu0
  %v446 = vadd.f32 %v411, %v445
  %v447 = vpop.f32.mrf.mxu0
  %448 = vdwg.mxu0
  %v449 = vmax.f32 %v446, 0.0
  %v450 = vld [vmem:[%s1] sm:$0x3]
  %v451 = vld [vmem:[%s2] sm:$0x3]
  %453 = vset.pattern.permute.xlu0 0
  %454 = vperm.xlu0 %453, %v451
  %v455 = vpop.permute.xlu0 %454
  %v457 = vmul.f32 %v450, %v455
  %v458 = vld [vmem:[%s4 + $0x1f8] sm:$0xff]
  %v459 = vld [vmem:[%s4 + $0x200] sm:$0xf]
  %v460 = vld [vmem:[%s4 + $0x204] sm:$0xff]
  %v461 = vld [vmem:[%s4 + $0x20c] sm:$0xf]
  %v462 = vld [vmem:[%s4 + $0x210] sm:$0xff]
  %v463 = vld [vmem:[%s4 + $0x218] sm:$0xf]
  %v464 = vld [vmem:[%s4 + $0x21c] sm:$0xff]
  %v465 = vld [vmem:[%s4 + $0x224] sm:$0xf]
  %v466 = vpack.c.bf16 %v449, %v449
  %v467 = vld [vmem:[%s4 + $0x228] sm:$0x11]
  %v468 = vld [vmem:[%s4 + $0x230] sm:$0x1]
  %v469 = vunpack.c.l.bf16 %v467
  %v470 = vunpack.c.h.bf16 %v467
  %v471 = vunpack.c.l.bf16 %v468
  %v472 = vperm.slane %v469, 0
  %v473 = vperm.slane %v470, 0
  %v474 = vperm.slane %v471, 0
  %v483 = vunpack.c.l.b16 %v458
  %v484 = vunpack.c.h.b16 %v458
  %v485 = vunpack.c.l.b16 %v459
  %v486 = vunpack.c.l.b16 %v460
  %v487 = vunpack.c.h.b16 %v460
  %v488 = vunpack.c.l.b16 %v461
  %v489 = vunpack.c.l.b16 %v462
  %v490 = vunpack.c.h.b16 %v462
  %v491 = vunpack.c.l.b16 %v463
  %v492 = vunpack.c.l.b16 %v464
  %v493 = vunpack.c.h.b16 %v464
  %v494 = vunpack.c.l.b16 %v465
  %v495 = vpack.c.b16 %v486, %v483
  %v496 = vpack.c.b16 %v487, %v484
  %v497 = vpack.c.b16 %v488, %v485
  %v498 = vpack.c.b16 %v492, %v489
  %v499 = vpack.c.b16 %v493, %v490
  %v500 = vpack.c.b16 %v494, %v491
  %vm507 = vcmask 261120
  %v509 = vsel %vm507, %v466, 0
  %511 = vmatpush.bf16.msra.mxu0 0
  %512 = vmatpush.bf16.msra.mxu0 0
  %513 = vmatpush.bf16.msra.mxu0 0
  %514 = vmatpush.bf16.msra.mxu0 0
  %515 = vmatpush.bf16.msra.mxu0 0
  %516 = vmatpush.bf16.msra.mxu0 0
  %517 = vmatpush.bf16.msra.mxu0 %v498
  %518 = vmatpush.bf16.msra.mxu0 %v495
  %519 = vmatmul.bf16.gmra.mxu0 %v509
  %v520 = vpop.f32.mrf.mxu0
  %v521 = vadd.f32 %v472, %v520
  %v522 = vpop.f32.mrf.mxu0
  %523 = vdwg.mxu0
  %524 = vmatpush.bf16.msra.mxu0 0
  %525 = vmatpush.bf16.msra.mxu0 0
  %526 = vmatpush.bf16.msra.mxu0 0
  %527 = vmatpush.bf16.msra.mxu0 0
  %528 = vmatpush.bf16.msra.mxu0 0
  %529 = vmatpush.bf16.msra.mxu0 0
  %530 = vmatpush.bf16.msra.mxu0 %v499
  %531 = vmatpush.bf16.msra.mxu0 %v496
  %532 = vmatmul.bf16.gmra.mxu0 %v509
  %v533 = vpop.f32.mrf.mxu0
  %v534 = vadd.f32 %v473, %v533
  %v535 = vpop.f32.mrf.mxu0
  %536 = vdwg.mxu0
  %537 = vmatpush.bf16.msra.mxu0 0
  %538 = vmatpush.bf16.msra.mxu0 0
  %539 = vmatpush.bf16.msra.mxu0 0
  %540 = vmatpush.bf16.msra.mxu0 0
  %541 = vmatpush.bf16.msra.mxu0 0
  %542 = vmatpush.bf16.msra.mxu0 0
  %543 = vmatpush.bf16.msra.mxu0 %v500
  %544 = vmatpush.bf16.msra.mxu0 %v497
  %545 = vmatmul.bf16.gmra.mxu0 %v509
  %v546 = vpop.f32.mrf.mxu0
  %v547 = vadd.f32 %v474, %v546
  %v548 = vpop.f32.mrf.mxu0
  %549 = vdwg.mxu0
  %v550 = vld [vmem:[%s4 + $0x240] sm:$0xff]
  %v551 = vld [vmem:[%s4 + $0x248] sm:$0xf]
  %v552 = vld [vmem:[%s4 + $0x24c] sm:$0xff]
  %v553 = vld [vmem:[%s4 + $0x254] sm:$0xf]
  %v554 = vld [vmem:[%s4 + $0x258] sm:$0xff]
  %v555 = vld [vmem:[%s4 + $0x260] sm:$0xf]
  %v556 = vld [vmem:[%s4 + $0x264] sm:$0xff]
  %v557 = vld [vmem:[%s4 + $0x26c] sm:$0xf]
  %v558 = vpack.c.bf16 %v457, %v457
  %v559 = vld [vmem:[%s4 + $0x270] sm:$0x11]
  %v560 = vld [vmem:[%s4 + $0x278] sm:$0x1]
  %v561 = vunpack.c.l.bf16 %v559
  %v562 = vunpack.c.h.bf16 %v559
  %v563 = vunpack.c.l.bf16 %v560
  %v564 = vperm.slane %v561, 0
  %v565 = vperm.slane %v562, 0
  %v566 = vperm.slane %v563, 0
  %v575 = vunpack.c.l.b16 %v550
  %v576 = vunpack.c.h.b16 %v550
  %v577 = vunpack.c.l.b16 %v551
  %v578 = vunpack.c.l.b16 %v552
  %v579 = vunpack.c.h.b16 %v552
  %v580 = vunpack.c.l.b16 %v553
  %v581 = vunpack.c.l.b16 %v554
  %v582 = vunpack.c.h.b16 %v554
  %v583 = vunpack.c.l.b16 %v555
  %v584 = vunpack.c.l.b16 %v556
  %v585 = vunpack.c.h.b16 %v556
  %v586 = vunpack.c.l.b16 %v557
  %v587 = vpack.c.b16 %v578, %v575
  %v588 = vpack.c.b16 %v579, %v576
  %v589 = vpack.c.b16 %v580, %v577
  %v590 = vpack.c.b16 %v584, %v581
  %v591 = vpack.c.b16 %v585, %v582
  %v592 = vpack.c.b16 %v586, %v583
  %v600 = vsel %vm507, %v558, 0
  %602 = vmatpush.bf16.msra.mxu0 0
  %603 = vmatpush.bf16.msra.mxu0 0
  %604 = vmatpush.bf16.msra.mxu0 0
  %605 = vmatpush.bf16.msra.mxu0 0
  %606 = vmatpush.bf16.msra.mxu0 0
  %607 = vmatpush.bf16.msra.mxu0 0
  %608 = vmatpush.bf16.msra.mxu0 %v590
  %609 = vmatpush.bf16.msra.mxu0 %v587
  %610 = vmatmul.bf16.gmra.mxu0 %v600
  %v611 = vpop.f32.mrf.mxu0
  %v612 = vadd.f32 %v564, %v611
  %v613 = vpop.f32.mrf.mxu0
  %614 = vdwg.mxu0
  %615 = vmatpush.bf16.msra.mxu0 0
  %616 = vmatpush.bf16.msra.mxu0 0
  %617 = vmatpush.bf16.msra.mxu0 0
  %618 = vmatpush.bf16.msra.mxu0 0
  %619 = vmatpush.bf16.msra.mxu0 0
  %620 = vmatpush.bf16.msra.mxu0 0
  %621 = vmatpush.bf16.msra.mxu0 %v591
  %622 = vmatpush.bf16.msra.mxu0 %v588
  %623 = vmatmul.bf16.gmra.mxu0 %v600
  %v624 = vpop.f32.mrf.mxu0
  %v625 = vadd.f32 %v565, %v624
  %v626 = vpop.f32.mrf.mxu0
  %627 = vdwg.mxu0
  %628 = vmatpush.bf16.msra.mxu0 0
  %629 = vmatpush.bf16.msra.mxu0 0
  %630 = vmatpush.bf16.msra.mxu0 0
  %631 = vmatpush.bf16.msra.mxu0 0
  %632 = vmatpush.bf16.msra.mxu0 0
  %633 = vmatpush.bf16.msra.mxu0 0
  %634 = vmatpush.bf16.msra.mxu0 %v592
  %635 = vmatpush.bf16.msra.mxu0 %v589
  %636 = vmatmul.bf16.gmra.mxu0 %v600
  %v637 = vpop.f32.mrf.mxu0
  %v638 = vadd.f32 %v566, %v637
  %v639 = vpop.f32.mrf.mxu0
  %640 = vdwg.mxu0
  %v641 = vadd.f32 %v521, %v612
  %v642 = vxor.u32 %v641, 2147483648
  %v643 = vmul.f32 %v642, 1.442695
  %v644 = vpow.pop %v643
  %v645 = vadd.f32 %v644, 1.0
  %v646 = vrcp.pop %v645
  %v647 = vmul.f32 %v645, %v646
  %v648 = vsub.f32 1.0, %v647
  %v649 = vmul.f32 %v646, %v648
  %v650 = vadd.f32 %v646, %v649
  %vm651 = vweird.f32 %v645
  %vm652 = vweird.f32 %v646
  %vm653 = vmor %vm651, %vm652
  %v654 = vsel %vm653, %v646, %v650
  %v655 = vand.u32 2147483647, %v645
  %vm656 = vcmp.eq.f32.partialorder %v655, 8.507059e+37
  %v657 = vand.u32 %v645, 2147483648
  %v658 = vor.u32 1.1754944e-38, %v657
  %v659 = vsel %vm656, %v658, %v654
  %v660 = vmul.f32 1.0, %v659
  %v661 = vadd.f32 %v534, %v625
  %v662 = vxor.u32 %v661, 2147483648
  %v663 = vmul.f32 %v662, 1.442695
  %v664 = vpow.pop %v663
  %v665 = vadd.f32 %v664, 1.0
  %v666 = vrcp.pop %v665
  %v667 = vmul.f32 %v665, %v666
  %v668 = vsub.f32 1.0, %v667
  %v669 = vmul.f32 %v666, %v668
  %v670 = vadd.f32 %v666, %v669
  %vm671 = vweird.f32 %v665
  %vm672 = vweird.f32 %v666
  %vm673 = vmor %vm671, %vm672
  %v674 = vsel %vm673, %v666, %v670
  %v675 = vand.u32 2147483647, %v665
  %vm676 = vcmp.eq.f32.partialorder %v675, 8.507059e+37
  %v677 = vand.u32 %v665, 2147483648
  %v678 = vor.u32 1.1754944e-38, %v677
  %v679 = vsel %vm676, %v678, %v674
  %v680 = vmul.f32 1.0, %v679
  %v681 = vmul.f32 %v660, %v638
  %v682 = vadd.f32 %v547, %v681
  %v683 = vtanh.pop %v682
  %v684 = vsub.f32 1.0, %v680
  %v685 = vmul.f32 %v684, %v683
  %v686 = vmul.f32 %v680, %v457
  %v687 = vadd.f32 %v685, %v686
  %v688 = vld [vmem:[%s4 + $0x288] sm:$0xff]
  %v689 = vld [vmem:[%s4 + $0x294] sm:$0xff]
  %v690 = vld [vmem:[%s4 + $0x2a0] sm:$0xff]
  %v691 = vld [vmem:[%s4 + $0x2ac] sm:$0xff]
  %v692 = vpack.c.bf16 %v687, %v687
  %v693 = vld [vmem:[%s4 + $0x2b8] sm:$0x11]
  %v694 = vunpack.c.l.bf16 %v693
  %v695 = vunpack.c.h.bf16 %v693
  %v696 = vperm.slane %v694, 0
  %v697 = vperm.slane %v695, 0
  %v702 = vunpack.c.l.b16 %v688
  %v703 = vunpack.c.h.b16 %v688
  %v704 = vunpack.c.l.b16 %v689
  %v705 = vunpack.c.h.b16 %v689
  %v706 = vunpack.c.l.b16 %v690
  %v707 = vunpack.c.h.b16 %v690
  %v708 = vunpack.c.l.b16 %v691
  %v709 = vunpack.c.h.b16 %v691
  %v710 = vpack.c.b16 %v704, %v702
  %v711 = vpack.c.b16 %v705, %v703
  %v712 = vpack.c.b16 %v708, %v706
  %v713 = vpack.c.b16 %v709, %v707
  %v719 = vsel %vm507, %v692, 0
  %721 = vmatpush.bf16.msra.mxu0 0
  %722 = vmatpush.bf16.msra.mxu0 0
  %723 = vmatpush.bf16.msra.mxu0 0
  %724 = vmatpush.bf16.msra.mxu0 0
  %725 = vmatpush.bf16.msra.mxu0 0
  %726 = vmatpush.bf16.msra.mxu0 0
  %727 = vmatpush.bf16.msra.mxu0 %v712
  %728 = vmatpush.bf16.msra.mxu0 %v710
  %729 = vmatmul.bf16.gmra.mxu0 %v719
  %v730 = vpop.f32.mrf.mxu0
  %v731 = vadd.f32 %v696, %v730
  %v732 = vpop.f32.mrf.mxu0
  %733 = vdwg.mxu0
  %734 = vmatpush.bf16.msra.mxu0 0
  %735 = vmatpush.bf16.msra.mxu0 0
  %736 = vmatpush.bf16.msra.mxu0 0
  %737 = vmatpush.bf16.msra.mxu0 0
  %738 = vmatpush.bf16.msra.mxu0 0
  %739 = vmatpush.bf16.msra.mxu0 0
  %740 = vmatpush.bf16.msra.mxu0 %v713
  %741 = vmatpush.bf16.msra.mxu0 %v711
  %742 = vmatmul.bf16.gmra.mxu0 %v719
  %v743 = vpop.f32.mrf.mxu0
  %v744 = vadd.f32 %v697, %v743
  %v745 = vpop.f32.mrf.mxu0
  %746 = vdwg.mxu0
  %vm747 = vcmask 25600
  %v748 = vsel %vm747, %v731, -inf
  %749 = vmax.xlane.f32.xlu0 %v748
  %v750 = vpop.xlane.xlu0 %749
  %v751 = vsub.f32 %v731, %v750
  %v752 = vmul.f32 %v751, 1.442695
  %v753 = vpow.pop %v752
  %v754 = vsel %vm747, %v753, 0.0
  %755 = vadd.xlane.f32.xlu0 %v754
  %v756 = vpop.xlane.xlu0 %755
  %v757 = vlog2.pop %v756
  %v758 = vmul.f32 %v757, 0.6931472
  %v759 = vadd.f32 %v758, %v750
  %v760 = vsub.f32 %v731, %v759
  %v761 = vlaneseq
  %v762 = vand.u32 %v761, 127
  %v763 = vcvt.s32.f32 %v762
  %vm764 = vcmp.eq.f32.partialorder %v731, %v750
  %v765 = vsel %vm764, %v763, 1e+09
  %v766 = vsel %vm747, %v765, inf
  %767 = vmin.xlane.f32.xlu0 %v766
  %v768 = vpop.xlane.xlu0 %767
  %v769 = vsel %vm747, %v760, -inf
  %770 = vmax.xlane.f32.xlu0 %v769
  %v771 = vpop.xlane.xlu0 %770
  %v772 = vsel %vm747, %v398, -inf
  %773 = vmax.xlane.f32.xlu0 %v772
  %v774 = vpop.xlane.xlu0 %773
  %vm775 = vcmp.eq.f32.partialorder %v398, %v774
  %v776 = vsel %vm775, %v763, 1e+09
  %v777 = vsel %vm747, %v776, inf
  %778 = vmin.xlane.f32.xlu0 %v777
  %v779 = vpop.xlane.xlu0 %778
  %780 = vst [vmem:[%s5] sm:$0xff] 0.0
  %781 = vst [vmem:[%s5 + $0x8] sm:$0xff] 0.0
  %vm782 = vcmask 1024
  %783 = vst.msk [vmem:[%s5] sm:$0x3] %vm782, %v744
  %784 = vst.msk [vmem:[%s5 + $0x2] sm:$0x3] %vm747, %v731
  %785 = vst.msk [vmem:[%s5 + $0x4] sm:$0x3] %vm747, %v760
  %786 = vst.msk [vmem:[%s5 + $0x6] sm:$0x3] %vm747, %v398
  %vm787 = vcmask 254976
  %788 = vst.msk [vmem:[%s5 + $0x8] sm:$0x3] %vm787, %v687
  %789 = vst.msk [vmem:[%s5 + $0xa] sm:$0x3] %vm782, %v768
  %790 = vst.msk [vmem:[%s5 + $0xc] sm:$0x3] %vm782, %v771
  %791 = vst.msk [vmem:[%s5 + $0xe] sm:$0x3] %vm782, %v779
  // Predicated region
  $region22: #{act.1} parent=0 // pred_check
    _
  $region23: #{act.1} parent=0 // pred_check_branch
    %793 = sbr.rel (0) target = $region25
  $region24: #{act.1} parent=0 // pred_region
    _
  $region25: #{act.1} parent=0 // pred_fallthru
    _
  // Predicated region
  $region26: #{act.1} parent=0 // pred_check
    _
  $region27: #{act.1} parent=0 // pred_check_branch
    %795 = sbr.rel (0) target = $region29
  $region28: #{act.1} parent=0 // pred_region
    _
  $region29: #{act.1} parent=0 // pred_fallthru
    _

</llo_original>
